<compile_context>
chip_gen: v5e
topology: v5e:2x2
jax: 0.10.0
libtpu: 0.0.40
codegen_flags: <defaults>
</compile_context>

<pallas_src>
import jax
import jax.numpy as jnp
from jax.experimental import pallas as pl
from jax.experimental.pallas import tpu as pltpu


def _sse_kernel(w_ref, x_ref, o_ref):
    """Fused 1x1-conv-to-1 + sigmoid + broadcast-multiply on one tile.

    w_ref: (C, 1) conv weights (sublane-major: lane broadcast is free).
    x_ref / o_ref: (BT, C, TS) tiles, lane axis = spatial.
    """
    x = x_ref[...]
    xf = x.astype(jnp.float32)                    # single upcast, reused below
    w = w_ref[...].astype(jnp.float32)            # (C, 1)
    # Per-pixel weighted channel sum -> (BT, 1, TS): VPU multiply + one
    # sublane (XLU) reduce; sigmoid goes to the EUP (free slot).
    att = jnp.sum(xf * w[None, :, :], axis=1, keepdims=True)
    att = jax.nn.sigmoid(att)
    if x.dtype == jnp.float32:
        y = xf * att
    else:
        # Keep the second elementwise pass in the narrow dtype (bf16 VALU):
        # avoids a second full-tile upcast and halves vreg traffic.
        y = x * att.astype(x.dtype)
    o_ref[...] = y.astype(o_ref.dtype)


def _round_up(n, m):
    return ((n + m - 1) // m) * m


def _sublane_multiple(dtype):
    # 8 sublanes for 4-byte types, 16 for 2-byte, 32 for 1-byte.
    return max(1, 32 // max(1, jnp.dtype(dtype).itemsize))


def _largest_aligned_divisor(n, align, cap):
    """Largest divisor of n that is a multiple of `align` and <= cap.

    Assumes align divides n; returns align if nothing bigger fits.
    """
    m = n // align
    best = 1
    for d in range(1, m + 1):
        if m % d == 0 and d * align <= cap:
            best = d
    return best * align


def _largest_divisor(n, cap):
    best = 1
    for d in range(1, min(n, cap) + 1):
        if n % d == 0:
            best = d
    return best


def sse_block(x, weight, *,
              tile_bytes=4 * 1024 * 1024,
              vmem_limit_bytes=32 * 1024 * 1024):
    """Pallas equivalent of sSEblock.forward(x).

    x:      (B, C, H, W)
    weight: Conv2d weight of shape (1, C, 1, 1) (anything reshapeable to (C,)).

    Tile policy: ~4 MiB per tile (in + out, each double-buffered => ~16 MiB
    live), which fits v7x's 32 MiB scoped VMEM; vmem_limit_bytes=32 MiB lifts
    v5e's 16 MiB default so the same tiles compile there too.
    """
    B, C, H, W = x.shape
    S = H * W
    itemsize = jnp.dtype(x.dtype).itemsize

    # Weight laid out (C, 1): sublane-major, so the in-kernel broadcast along
    # lanes needs no lane->sublane relayout each grid step.
    w = weight.reshape(C, 1).astype(jnp.float32)

    x2 = x.reshape(B, C, S)

    # Pad the spatial (lane) axis to a multiple of 128: lane-dense unmasked
    # stores and bounded tiles even when S is ragged.  Padded lanes are
    # sliced off afterwards (their values never escape).
    Sp = _round_up(S, 128)
    if Sp != S:
        x2 = jnp.pad(x2, ((0, 0), (0, 0), (0, Sp - S)))

    # --- tile-size policy --------------------------------------------------
    # VMEM accounting includes sublane padding: a (C, TS) plane occupies
    # ceil(C / sub) * sub sublanes (sub = 8 f32 / 16 bf16 / 32 int8).
    C_pad = _round_up(C, _sublane_multiple(x.dtype))
    slab_bytes = C_pad * 128 * itemsize          # bytes of one (C_pad, 128) slab

    # 1) Grow the spatial tile first (long contiguous DMA rows, lane-dense
    #    stores); target ~tile_bytes for a single batch row.
    lane_cap = max(128, (tile_bytes // max(1, slab_bytes)) * 128)
    TS = _largest_aligned_divisor(Sp, 128, lane_cap)

    # 2) Then grow the batch tile within the same budget.
    tile_row_bytes = C_pad * TS * itemsize
    BT = _largest_divisor(B, max(1, tile_bytes // max(1, tile_row_bytes)))

    # 3) v7x megacore: make sure at least one parallel axis has >= 2 steps so
    #    both TensorCores get work (harmless on 1-TC v5e/v6e).
    if (B // BT) * (Sp // TS) < 2:
        if B > 1:
            BT = _largest_divisor(B, B // 2)
        elif Sp // 128 > 1:
            TS = _largest_aligned_divisor(Sp, 128, Sp // 2)

    grid = (B // BT, Sp // TS)

    out = pl.pallas_call(
        _sse_kernel,
        out_shape=jax.ShapeDtypeStruct((B, C, Sp), x.dtype),
        grid_spec=pltpu.PrefetchScalarGridSpec(
            num_scalar_prefetch=0,
            grid=grid,
            in_specs=[
                pl.BlockSpec((C, 1), lambda b, s: (0, 0)),           # weights
                pl.BlockSpec((BT, C, TS), lambda b, s: (b, 0, s)),   # x tile
            ],
            out_specs=pl.BlockSpec((BT, C, TS), lambda b, s: (b, 0, s)),
        ),
        compiler_params=pltpu.CompilerParams(
            # Both axes independent -> megacore-shardable on v7x.
            dimension_semantics=("parallel", "parallel"),
            vmem_limit_bytes=vmem_limit_bytes,
        ),
        cost_estimate=pl.CostEstimate(
            flops=3 * B * C * S,                 # reduce (mul+add) + final mul
            transcendentals=B * S,               # sigmoid per pixel
            bytes_accessed=2 * B * C * S * itemsize + C * 4,
        ),
    )(w, x2)

    if Sp != S:
        out = out[:, :, :S]
    return out.reshape(B, C, H, W)


if __name__ == "__main__":
    key = jax.random.PRNGKey(0)
    k1, k2 = jax.random.split(key)

    B, C, H, W = 2, 4, 16, 16
    x = jax.random.normal(k1, (B, C, H, W), dtype=jnp.float32)
    # Conv2d(C, 1, kernel_size=1, bias=False) weight.  Init values don't
    # affect forward semantics; random stand-in for kaiming_uniform.
    weight = jax.random.normal(k2, (1, C, 1, 1), dtype=jnp.float32) * 0.5

    out = sse_block(x, weight)
    out = jax.block_until_ready(out)

    # Plain-JAX reference: sigmoid(1x1 conv) * x.
    att_ref = jax.nn.sigmoid(
        jnp.einsum("bchw,c->bhw", x, weight.reshape(C))[:, None, :, :]
    )
    ref = x * att_ref

    assert out.shape == x.shape
    assert jnp.allclose(out, ref, atol=1e-5, rtol=1e-5), "mismatch vs reference"

    print("KERNEL_OK")
</pallas_src>

<mosaic_0001>
module attributes {stable_mosaic.version = 11 : i64} {
  func.func @_sse_kernel(%arg0: i32, %arg1: i32, %arg2: memref<4x1xf32, #tpu.memory_space<vmem>>, %arg3: memref<1x4x256xf32, #tpu.memory_space<vmem>>, %arg4: memref<1x4x256xf32, #tpu.memory_space<vmem>>) attributes {dimension_semantics = [#tpu.dimension_semantics<parallel>, #tpu.dimension_semantics<parallel>], iteration_bounds = array<i64: 2, 1>, scalar_prefetch = 0 : i64, scratch_operands = 0 : i64, tpu.core_type = #tpu.core_type<tc>, window_params = [{pipeline_mode = #tpu.pipeline_mode<synchronous>, transform_indices = @transform_0, window_bounds = array<i64: 4, 1>}, {transform_indices = @transform_1, window_bounds = array<i64: 1, 4, 256>}, {transform_indices = @transform_2, window_bounds = array<i64: 1, 4, 256>}]} {
    %c0 = arith.constant 0 : index
    %c0_0 = arith.constant 0 : index
    %c0_1 = arith.constant 0 : index
    %0 = vector.load %arg3[%c0, %c0_0, %c0_1] : memref<1x4x256xf32, #tpu.memory_space<vmem>>, vector<1x4x256xf32>
    %c0_2 = arith.constant 0 : index
    %c0_3 = arith.constant 0 : index
    %1 = vector.load %arg2[%c0_2, %c0_3] : memref<4x1xf32, #tpu.memory_space<vmem>>, vector<4x1xf32>
    %2 = vector.shape_cast %1 : vector<4x1xf32> to vector<1x4x1xf32>
    %3 = vector.broadcast %2 : vector<1x4x1xf32> to vector<1x4x256xf32>
    %4 = arith.mulf %0, %3 : vector<1x4x256xf32>
    %cst = arith.constant dense<0.000000e+00> : vector<1x256xf32>
    %5 = vector.multi_reduction <add>, %4, %cst [1] : vector<1x4x256xf32> to vector<1x256xf32>
    %6 = vector.shape_cast %5 : vector<1x256xf32> to vector<1x1x256xf32>
    %7 = arith.negf %6 : vector<1x1x256xf32>
    %8 = math.exp %7 : vector<1x1x256xf32>
    %cst_4 = arith.constant 1.000000e+00 : f32
    %9 = vector.broadcast %cst_4 : f32 to vector<1x1x256xf32>
    %10 = arith.addf %9, %8 : vector<1x1x256xf32>
    %11 = arith.divf %9, %10 : vector<1x1x256xf32>
    %12 = vector.broadcast %11 : vector<1x1x256xf32> to vector<1x4x256xf32>
    %13 = arith.mulf %0, %12 : vector<1x4x256xf32>
    %c0_5 = arith.constant 0 : index
    %c0_6 = arith.constant 0 : index
    %c0_7 = arith.constant 0 : index
    %14 = vector.load %arg4[%c0_5, %c0_6, %c0_7] : memref<1x4x256xf32, #tpu.memory_space<vmem>>, vector<1x4x256xf32>
    tpu.vector_store %arg4[%c0_5, %c0_6, %c0_7], %13 {strides = array<i32>} : memref<1x4x256xf32, #tpu.memory_space<vmem>>, vector<1x4x256xf32>,
    return
  }
  func.func @transform_0(%arg0: i32, %arg1: i32) -> (i32, i32) {
    %c0_i32 = arith.constant 0 : i32
    %c0_i32_0 = arith.constant 0 : i32
    %c0_i32_1 = arith.constant 0 : i32
    return %c0_i32, %c0_i32_0 : i32, i32
  }
  func.func @transform_1(%arg0: i32, %arg1: i32) -> (i32, i32, i32) {
    %c0_i32 = arith.constant 0 : i32
    %c0_i32_0 = arith.constant 0 : i32
    return %arg0, %c0_i32, %arg1 : i32, i32, i32
  }
  func.func @transform_2(%arg0: i32, %arg1: i32) -> (i32, i32, i32) {
    %c0_i32 = arith.constant 0 : i32
    %c0_i32_0 = arith.constant 0 : i32
    return %arg0, %c0_i32, %arg1 : i32, i32, i32
  }
}

</mosaic_0001>

<llo_original>
// kernel: tpu_custom_call.1
$region0: #{tpu_custom_call.1}
  #allocation0 [shape = 'u32[]', space=smem, size = 0x4, offset = 0x4, fixed_abs, tag = 'smem constant byte address 0x4 - core index']
  #allocation1 [shape = 'u32[72,128]{1,0:T(1,128)}', space=vmem, size = 0x9000, scoped, tag = 'internal scratch']
  %s0 = inlined_call_operand.vmem [shape: f32[4,1], index: 0, kind: input, shape index: {}]
  %s1 = inlined_call_operand.hbm [shape: f32[2,4,256], index: 1, kind: input, shape index: {}]
  %s2 = inlined_call_operand.hbm [shape: f32[2,4,256], index: 2, kind: output, shape index: {}]
  %s3 = sld [smem:[#allocation0]]
  $region45: #{tpu_custom_call.1} parent=0
    _
  %s5 = ssub.s32 1, %s3
  %s6 = scalar_select 0, %s5, %s3
  $region1: #{tpu_custom_call.1} parent=0
    #allocation2 [shape = 'u8[8192]{0}', space=vmem, size = 0x2000, scoped, tag = 'input window, operand 1']
    #allocation3 [shape = 's32[2]{0}', space=sflag, size = 0x8, scoped, tag = 'scoped memory for tpu_custom_call.1']
    #allocation4 [shape = 's32[2]{0}', space=sflag, size = 0x8, scoped, tag = 'scoped memory for tpu_custom_call.1']
    #allocation5 [shape = 'u8[8192]{0}', space=vmem, size = 0x2000, scoped, tag = 'output window, operand 0']
    %7 = vsyncpa [#allocation3], 0
    %s8 = scalar_lea.sflag [#allocation3], 1
    %9 = vsyncpa %s8, 0
    %10 = vsyncpa [#allocation4], 0
    %s11 = scalar_lea.sflag [#allocation4], 1
    %12 = vsyncpa %s11, 0
    loop: start=0, step=1, limit=4
    $region2: #{tpu_custom_call.1} parent=1 // loop_pre_header
      _
    $region3: #{tpu_custom_call.1} parent=1 // loop_header
      %s14 = sphi 0, %s18
      %p15 = scmp.ge.s32.totalorder %s14, 4
      %s21 = sphi 0, %s33
      %s22 = sphi 0, %s29
      %s23 = sphi 0, %s21
      %s24 = sphi 0, %s22
      %s25 = sphi 0, %s23
      %s26 = sphi 0, %s24
      %s34 = sphi 0, %s34
      %s36 = sphi 0, %s34
      %s37 = sphi 0, %s36
      %s51 = sphi 0, %s37
      %s59 = sphi 0, %s61
      %s62 = sphi 0, %s59
      %s63 = sphi 0, %s62
      %s79 = sphi 0, %s63
      %s87 = sphi 0, %s89
      %s90 = sphi 0, %s87
      %s91 = sphi 0, %s90
      %s107 = sphi 0, %s91
    $region4: #{tpu_custom_call.1} parent=1 // loop_header_branch
      %17 = sbr.rel (%p15) target = $region8
    $region5: #{tpu_custom_call.1} parent=1 // loop_body
      %s19 = ssub.s32 %s14, 1
      %s20 = ssub.s32 %s14, 2
      %s27 = sadd.s32 1, %s22
      %p28 = scmp.ge.s32.totalorder %s27, 1
      %s29 = scalar_select %p28, 0, %s27
      %s30 = sadd.s32 1, %s21
      %s31 = scalar_select %p28, %s30, %s21
      %p32 = scmp.ge.s32.totalorder %s31, 2
      %s33 = scalar_select %p32, 0, %s31
      %s35 = sadd.s32 %s34, 1
      %p38 = scmp.eq.s32.totalorder %s14, 1
      %p39 = scmp.ne.s32.totalorder %s34, %s36
      %p40 = scmp.eq.s32.totalorder %s14, 0
      %p41 = por %p39, %p40
      %p42 = scmp.ne.s32.totalorder %s34, %s36
      %p43 = scmp.eq.s32.totalorder %s19, 1
      %p44 = por %p42, %p43
      %p45 = scmp.ne.s32.totalorder %s36, %s37
      %p46 = scmp.eq.s32.totalorder %s19, 0
      %p47 = por %p45, %p46
      %p48 = scmp.ne.s32.totalorder %s36, %s37
      %p49 = scmp.eq.s32.totalorder %s20, 1
      %p50 = por %p48, %p49
      %p52 = scmp.ne.s32.totalorder %s37, %s51
      %p53 = scmp.eq.s32.totalorder %s20, 0
      %p54 = por %p52, %p53
      %s55 = ssub.s32 %s21, %s33
      %s56 = ssub.s32 %s22, %s29
      %s57 = sor.u32 %s55, %s56
      %p58 = scmp.eq.s32.totalorder %s57, 0
      %s60 = sadd.s32 %s59, 1
      %s61 = scalar_select %p58, %s59, %s60
      %p64 = pneg %p58
      %p65 = scmp.eq.s32.totalorder %s14, 1
      %p66 = por %p64, %p65
      %p67 = scmp.ne.s32.totalorder %s59, %s62
      %p68 = scmp.eq.s32.totalorder %s14, 0
      %p69 = por %p67, %p68
      %p70 = scmp.ne.s32.totalorder %s59, %s62
      %p71 = scmp.eq.s32.totalorder %s19, 1
      %p72 = por %p70, %p71
      %p73 = scmp.ne.s32.totalorder %s62, %s63
      %p74 = scmp.eq.s32.totalorder %s19, 0
      %p75 = por %p73, %p74
      %p76 = scmp.ne.s32.totalorder %s62, %s63
      %p77 = scmp.eq.s32.totalorder %s20, 1
      %p78 = por %p76, %p77
      %p80 = scmp.ne.s32.totalorder %s63, %s79
      %p81 = scmp.eq.s32.totalorder %s20, 0
      %p82 = por %p80, %p81
      %s83 = ssub.s32 %s21, %s33
      %s84 = ssub.s32 %s22, %s29
      %s85 = sor.u32 %s83, %s84
      %p86 = scmp.eq.s32.totalorder %s85, 0
      %s88 = sadd.s32 %s87, 1
      %s89 = scalar_select %p86, %s87, %s88
      %p92 = pneg %p86
      %p93 = scmp.eq.s32.totalorder %s14, 1
      %p94 = por %p92, %p93
      %p95 = scmp.ne.s32.totalorder %s87, %s90
      %p96 = scmp.eq.s32.totalorder %s14, 0
      %p97 = por %p95, %p96
      %p98 = scmp.ne.s32.totalorder %s87, %s90
      %p99 = scmp.eq.s32.totalorder %s19, 1
      %p100 = por %p98, %p99
      %p101 = scmp.ne.s32.totalorder %s90, %s91
      %p102 = scmp.eq.s32.totalorder %s19, 0
      %p103 = por %p101, %p102
      %p104 = scmp.ne.s32.totalorder %s90, %s91
      %p105 = scmp.eq.s32.totalorder %s20, 1
      %p106 = por %p104, %p105
      %p108 = scmp.ne.s32.totalorder %s91, %s107
      %p109 = scmp.eq.s32.totalorder %s20, 0
      %p110 = por %p108, %p109
      %p111 = scmp.le.s32.totalorder 1, %s14
      %p112 = scmp.lt.s32.totalorder %s14, 3
      %p113 = pnand %p111, %p112
      %p114 = pneg %p113
      // Predicated region
      $region9: #{tpu_custom_call.1} parent=5 // pred_check
        _
      $region10: #{tpu_custom_call.1} parent=5 // pred_check_branch
        %116 = sbr.rel (%p113) target = $region12
      $region11: #{tpu_custom_call.1} parent=5 // pred_region
        %s117 = ssub.s32 %s14, 1
        // Predicated region
        $region13: #{tpu_custom_call.1} parent=11 // pred_check
          %p118 = pneg %p47
        $region14: #{tpu_custom_call.1} parent=11 // pred_check_branch
          %120 = sbr.rel (%p118) target = $region16
        $region15: #{tpu_custom_call.1} parent=11 // pred_region
          _
        $region16: #{tpu_custom_call.1} parent=11 // pred_fallthru
          _
      $region12: #{tpu_custom_call.1} parent=5 // pred_fallthru
        _
      %p121 = scmp.lt.s32.totalorder %s14, 2
      // Predicated region
      $region17: #{tpu_custom_call.1} parent=5 // pred_check
        %p122 = pneg %p121
      $region18: #{tpu_custom_call.1} parent=5 // pred_check_branch
        %124 = sbr.rel (%p122) target = $region20
      $region19: #{tpu_custom_call.1} parent=5 // pred_region
        // Predicated region
        $region21: #{tpu_custom_call.1} parent=19 // pred_check
          %p125 = pneg %p69
        $region22: #{tpu_custom_call.1} parent=19 // pred_check_branch
          %127 = sbr.rel (%p125) target = $region24
        $region23: #{tpu_custom_call.1} parent=19 // pred_region
          %s128 = sand.u32 %s59, 1
          %s129 = scalar_lea.sflag [#allocation3], %s128
          %s130 = sand.u32 %s59, 1
          %s131 = smul.addr %s130, 8
          %s132 = scalar_lea.vmem [#allocation2], %s131
          %s133 = smul.u32 2, %s22
          %135 = vsyncadd %s129, 0
          %s136 = smul.addr %s21, 2
          %s137 = sadd.s32 %s133, %s136
          %s138 = smul.addr %s137, 4
          %s139 = scalar_lea.hbm %s1, %s138
          %s141 = sshll.u32 %s139, 4
          %s142 = int_to_ptr.hbm [resolvable:$true] %s141
          %s143 = sshll.u32 %s132, 4
          %s144 = int_to_ptr.vmem [resolvable:$true] %s143
          %146 = dma.hbm_to_vmem [thread:$0]  %s142, 128, %s144, %s129
        $region24: #{tpu_custom_call.1} parent=19 // pred_fallthru
          _
      $region20: #{tpu_custom_call.1} parent=5 // pred_fallthru
        _
      %p147 = scmp.le.s32.totalorder 1, %s14
      %p148 = scmp.lt.s32.totalorder %s14, 3
      %p149 = pnand %p147, %p148
      %p150 = pneg %p149
      // Predicated region
      $region25: #{tpu_custom_call.1} parent=5 // pred_check
        _
      $region26: #{tpu_custom_call.1} parent=5 // pred_check_branch
        %152 = sbr.rel (%p149) target = $region28
      $region27: #{tpu_custom_call.1} parent=5 // pred_region
        %s153 = ssub.s32 %s14, 1
        %s154 = sand.u32 %s62, 1
        %s155 = scalar_lea.sflag [#allocation3], %s154
        %s156 = sand.u32 %s62, 1
        %s157 = smul.addr %s156, 8
        %s158 = scalar_lea.vmem [#allocation2], %s157
        // Predicated region
        $region29: #{tpu_custom_call.1} parent=27 // pred_check
          %p159 = pneg %p75
        $region30: #{tpu_custom_call.1} parent=27 // pred_check_branch
          %161 = sbr.rel (%p159) target = $region32
        $region31: #{tpu_custom_call.1} parent=27 // pred_region
          %163 = dma.done %s155, 128
        $region32: #{tpu_custom_call.1} parent=27 // pred_fallthru
          _
        %p164 = pneg %p47
        %p165 = pneg %p44
        %s166 = sand.u32 %s62, 1
        %s167 = scalar_lea.sflag [#allocation3], %s166
        %s168 = sand.u32 %s62, 1
        %s169 = smul.addr %s168, 8
        %s170 = scalar_lea.vmem [#allocation2], %s169
        %p171 = pneg %p75
        %p172 = pneg %p72
        %p173 = pneg %p103
        %p174 = pneg %p100
        %s175 = sand.u32 %s90, 1
        %s176 = scalar_lea.sflag [#allocation4], %s175
        %s177 = sand.u32 %s90, 1
        %s178 = smul.addr %s177, 8
        %s179 = scalar_lea.vmem [#allocation5], %s178
        %s180 = smul.u32 2, %s24
        %s181 = smul.u32 2, %s24
        %v182 = vld [vmem:[%s158] sm:$0xff]
        %v183 = vld [vmem:[%s0] sm:$0xf]
        %185 = vset.pattern.permute.xlu0 0
        %186 = vperm.xlu0 %185, %v183
        %v187 = vpop.permute.xlu0 %186
        %v189 = vunpack.c.l.s4 839922192
        %v190 = vunpack.c.0.s8 %v189
        %v191 = vperm.slane %v187, %v190
        %v193 = vmul.f32 %v182, %v191
        %195 = vst [vmem:[#allocation1] ss:$2 sm:$0xff] %v193
        %v196 = vld.sshfl [vmem:[#allocation1] sm:$0xff pattern:$0x75316420]
        %v197 = vld.sshfl [vmem:[#allocation1 + $0x8] sm:$0xff pattern:$0x75316420]
        %vm200 = vcmask 1043456
        %v201 = vsel %vm200, %v196, 0.0
        %v202 = vrot.slane %v201, 4
        %v203 = vadd.f32 %v201, %v202
        %v204 = vrot.slane %v203, 2
        %v205 = vadd.f32 %v203, %v204
        %v206 = vrot.slane %v205, 1
        %v207 = vadd.f32 %v205, %v206
        %v208 = vsel %vm200, %v197, 0.0
        %v209 = vrot.slane %v208, 4
        %v210 = vadd.f32 %v208, %v209
        %v211 = vrot.slane %v210, 2
        %v212 = vadd.f32 %v210, %v211
        %v213 = vrot.slane %v212, 1
        %v214 = vadd.f32 %v212, %v213
        %v215 = vxor.u32 %v207, 2147483648
        %v216 = vxor.u32 %v214, 2147483648
        %v217 = vmul.f32 %v215, 1.442695
        %v218 = vpow.pop %v217
        %v219 = vmul.f32 %v216, 1.442695
        %v220 = vpow.pop %v219
        %v221 = vadd.f32 %v218, 1.0
        %v222 = vadd.f32 %v220, 1.0
        %v223 = vrcp.pop %v221
        %v224 = vmul.f32 %v221, %v223
        %v225 = vsub.f32 1.0, %v224
        %v226 = vmul.f32 %v223, %v225
        %v227 = vadd.f32 %v223, %v226
        %vm228 = vweird.f32 %v221
        %vm229 = vweird.f32 %v223
        %vm230 = vmor %vm228, %vm229
        %v231 = vsel %vm230, %v223, %v227
        %v232 = vand.u32 2147483647, %v221
        %vm233 = vcmp.eq.f32.partialorder %v232, 8.507059e+37
        %v234 = vand.u32 %v221, 2147483648
        %v235 = vor.u32 1.1754944e-38, %v234
        %v236 = vsel %vm233, %v235, %v231
        %v237 = vmul.f32 1.0, %v236
        %v238 = vrcp.pop %v222
        %v239 = vmul.f32 %v222, %v238
        %v240 = vsub.f32 1.0, %v239
        %v241 = vmul.f32 %v238, %v240
        %v242 = vadd.f32 %v238, %v241
        %vm243 = vweird.f32 %v222
        %vm244 = vweird.f32 %v238
        %vm245 = vmor %vm243, %vm244
        %v246 = vsel %vm245, %v238, %v242
        %v247 = vand.u32 2147483647, %v222
        %vm248 = vcmp.eq.f32.partialorder %v247, 8.507059e+37
        %v249 = vand.u32 %v222, 2147483648
        %v250 = vor.u32 1.1754944e-38, %v249
        %v251 = vsel %vm248, %v250, %v246
        %v252 = vmul.f32 1.0, %v251
        %v255 = vrot.slane %v252, 4
        %v256 = vsel %vm200, %v237, %v255
        %v258 = vmul.f32 %v182, %v256
        %259 = vst [vmem:[%s179] sm:$0xff] %v258
        %s260 = sand.u32 %s90, 1
        %s261 = scalar_lea.sflag [#allocation4], %s260
        %s262 = sand.u32 %s90, 1
        %s263 = smul.addr %s262, 8
        %s264 = scalar_lea.vmem [#allocation5], %s263
        // Predicated region
        $region33: #{tpu_custom_call.1} parent=27 // pred_check
          %p265 = pneg %p100
        $region34: #{tpu_custom_call.1} parent=27 // pred_check_branch
          %267 = sbr.rel (%p265) target = $region36
        $region35: #{tpu_custom_call.1} parent=27 // pred_region
          %s268 = smul.u32 2, %s24
          %270 = vsyncadd %s261, 0
          %s271 = smul.addr %s23, 2
          %s272 = sadd.s32 %s268, %s271
          %s273 = smul.addr %s272, 4
          %s274 = scalar_lea.hbm %s2, %s273
          %s276 = sshll.u32 %s264, 4
          %s277 = int_to_ptr.vmem [resolvable:$true] %s276
          %s278 = sshll.u32 %s274, 4
          %s279 = int_to_ptr.hbm [resolvable:$true] %s278
          %281 = dma.vmem_to_hbm [thread:$0]  %s277, 128, %s279, %s261
        $region36: #{tpu_custom_call.1} parent=27 // pred_fallthru
          _
      $region28: #{tpu_custom_call.1} parent=5 // pred_fallthru
        _
      %p282 = scmp.le.s32.totalorder 2, %s14
      // Predicated region
      $region37: #{tpu_custom_call.1} parent=5 // pred_check
        %p283 = pneg %p282
      $region38: #{tpu_custom_call.1} parent=5 // pred_check_branch
        %285 = sbr.rel (%p283) target = $region40
      $region39: #{tpu_custom_call.1} parent=5 // pred_region
        %s286 = ssub.s32 %s14, 2
        // Predicated region
        $region41: #{tpu_custom_call.1} parent=39 // pred_check
          %p287 = pneg %p106
        $region42: #{tpu_custom_call.1} parent=39 // pred_check_branch
          %289 = sbr.rel (%p287) target = $region44
        $region43: #{tpu_custom_call.1} parent=39 // pred_region
          %s290 = sand.u32 %s91, 1
          %s291 = scalar_lea.sflag [#allocation4], %s290
          %s292 = sand.u32 %s91, 1
          %s293 = smul.addr %s292, 8
          %s294 = scalar_lea.vmem [#allocation5], %s293
          %296 = dma.done %s291, 128
        $region44: #{tpu_custom_call.1} parent=39 // pred_fallthru
          _
      $region40: #{tpu_custom_call.1} parent=5 // pred_fallthru
        _
    $region6: #{tpu_custom_call.1} parent=1 // loop_footer
      %s18 = sadd.s32 1, %s14
    $region7: #{tpu_custom_call.1} parent=1 // loop_footer_branch
      %13 = sbr.rel target = $region3
    $region8: #{tpu_custom_call.1} parent=1 // loop_exit
      _
    %297 = vsyncpa [#allocation3], 1
    %s298 = scalar_lea.sflag [#allocation3], 1
    %299 = vsyncpa %s298, 1
    %300 = vsyncpa [#allocation4], 1
    %s301 = scalar_lea.sflag [#allocation4], 1
    %302 = vsyncpa %s301, 1

</llo_original>
